<compile_context>
chip_gen: v7x
topology: tpu7x:2x2x1
jax: 0.10.0
libtpu: 0.0.40
codegen_flags: <defaults>
</compile_context>

<pallas_src>
import functools
import math

import jax
import jax.numpy as jnp
from jax.experimental import pallas as pl
from jax.experimental.pallas import tpu as pltpu


# --------------------------------------------------------------------------- #
# Positional table construction — identical math to the PyTorch __init__.
# --------------------------------------------------------------------------- #
def make_pos_embedding(emb_size: int, maxlen: int = 5000) -> jnp.ndarray:
    den = jnp.exp(
        -jnp.arange(0, emb_size, 2, dtype=jnp.float32) * (math.log(10000.0) / emb_size)
    )
    pos = jnp.arange(0, maxlen, dtype=jnp.float32).reshape(maxlen, 1)
    pe = jnp.zeros((maxlen, emb_size), dtype=jnp.float32)
    pe = pe.at[:, 0::2].set(jnp.sin(pos * den))
    pe = pe.at[:, 1::2].set(jnp.cos(pos * den))
    return pe[:, None, :]  # (maxlen, 1, emb_size)


# --------------------------------------------------------------------------- #
# Kernels (2D lane-dense layout: x/out are (TILE_S, B*E), pe is (TILE_S, E)).
# --------------------------------------------------------------------------- #
def _pe_add_kernel(x_ref, pe_ref, o_ref, *, batch):
    pe = pe_ref[...]                                   # (TILE_S, E)
    pe_b = jnp.tile(pe, (1, batch)) if batch > 1 else pe   # broadcast over batch
    o_ref[...] = x_ref[...] + pe_b


def _pe_add_dropout_kernel(x_ref, pe_ref, mask_ref, o_ref, *, batch):
    pe = pe_ref[...]
    pe_b = jnp.tile(pe, (1, batch)) if batch > 1 else pe
    # mask_ref already holds keep/(1-p) (inverted dropout), 0 where dropped.
    o_ref[...] = (x_ref[...] + pe_b) * mask_ref[...]


# --------------------------------------------------------------------------- #
# Wrapper
# --------------------------------------------------------------------------- #
def _choose_tile_s(seq_len: int, row_bytes: int, target_bytes: int = 2 << 20) -> int:
    """Largest sequence tile whose x-block stays ~<= target_bytes, multiple of 8."""
    tile = max(1, target_bytes // max(1, row_bytes))
    if tile >= seq_len:
        return seq_len                     # single full block (equals full dim)
    tile = max(8, (tile // 8) * 8)         # keep (8, ·) sublane alignment
    return min(tile, seq_len)


def positional_encoding_forward(
    token_embedding: jnp.ndarray,   # (S, B, E)
    pos_embedding: jnp.ndarray,     # (maxlen, 1, E)
    *,
    dropout_p: float = 0.0,
    rng_key=None,
    training: bool = True,
) -> jnp.ndarray:
    S, B, E = token_embedding.shape
    dtype = token_embedding.dtype
    BE = B * E

    apply_dropout = training and dropout_p > 0.0
    if apply_dropout and dropout_p >= 1.0:
        # nn.Dropout(p=1.0) zeroes everything in train mode.
        return jnp.zeros_like(token_embedding)

    # Lane-dense 2D views (glue; no compute).
    x2d = token_embedding.reshape(S, BE)
    pe2d = pos_embedding[:S, 0, :].astype(dtype)       # (S, E)

    tile_s = _choose_tile_s(S, BE * jnp.dtype(dtype).itemsize)
    grid = (pl.cdiv(S, tile_s),)

    x_spec = pl.BlockSpec((tile_s, BE), lambda i: (i, 0))
    pe_spec = pl.BlockSpec((tile_s, E), lambda i: (i, 0))
    out_spec = pl.BlockSpec((tile_s, BE), lambda i: (i, 0))

    compiler_params = pltpu.CompilerParams(
        dimension_semantics=("parallel",),   # v7x: shard S-tiles across both TCs
        vmem_limit_bytes=64 << 20,
    )

    if apply_dropout:
        if rng_key is None:
            rng_key = jax.random.PRNGKey(0)
        keep = jax.random.bernoulli(rng_key, 1.0 - dropout_p, (S, BE))
        scale = jnp.asarray(1.0 / (1.0 - dropout_p), dtype)
        mask = keep.astype(dtype) * scale              # inverted-dropout mask

        kernel = functools.partial(_pe_add_dropout_kernel, batch=B)
        out2d = pl.pallas_call(
            kernel,
            out_shape=jax.ShapeDtypeStruct((S, BE), dtype),
            grid=grid,
            in_specs=[x_spec, pe_spec, x_spec],
            out_specs=out_spec,
            compiler_params=compiler_params,
        )(x2d, pe2d, mask)
    else:
        kernel = functools.partial(_pe_add_kernel, batch=B)
        out2d = pl.pallas_call(
            kernel,
            out_shape=jax.ShapeDtypeStruct((S, BE), dtype),
            grid=grid,
            in_specs=[x_spec, pe_spec],
            out_specs=out_spec,
            compiler_params=compiler_params,
        )(x2d, pe2d)

    return out2d.reshape(S, B, E)


# --------------------------------------------------------------------------- #
# Self-test
# --------------------------------------------------------------------------- #
if __name__ == "__main__":
    SEQ, BATCH, EMB = 8, 2, 32
    DROPOUT = 0.1

    key = jax.random.PRNGKey(0)
    kx, kd = jax.random.split(key)
    x = jax.random.normal(kx, (SEQ, BATCH, EMB), dtype=jnp.float32)

    pos_embedding = make_pos_embedding(EMB, maxlen=5000)      # (5000, 1, 32)
    ref = x + pos_embedding[:SEQ]                             # pure-JAX reference

    # Eval mode (dropout inactive).
    out_eval = positional_encoding_forward(
        x, pos_embedding, dropout_p=DROPOUT, training=False
    )
    out_eval = jax.block_until_ready(out_eval)
    assert out_eval.shape == (SEQ, BATCH, EMB)
    assert jnp.allclose(out_eval, ref, atol=1e-6, rtol=1e-6), "mismatch vs reference"

    # Train mode (dropout active): every element is either 0 or (x+pe)/(1-p).
    out_train = positional_encoding_forward(
        x, pos_embedding, dropout_p=DROPOUT, rng_key=kd, training=True
    )
    out_train = jax.block_until_ready(out_train)
    assert out_train.shape == (SEQ, BATCH, EMB)
    scaled_ref = ref / (1.0 - DROPOUT)
    ok = jnp.isclose(out_train, scaled_ref, atol=1e-5) | jnp.isclose(
        out_train, 0.0, atol=1e-6
    )
    assert bool(jnp.all(ok)), "dropout output not {0, scaled(x+pe)}"

    print("KERNEL_OK")
</pallas_src>

<mosaic_0001>
module attributes {stable_mosaic.version = 11 : i64} {
  func.func @_pe_add_kernel(%arg0: i32, %arg1: memref<8x64xf32, #tpu.memory_space<vmem>>, %arg2: memref<8x32xf32, #tpu.memory_space<vmem>>, %arg3: memref<8x64xf32, #tpu.memory_space<vmem>>) attributes {dimension_semantics = [#tpu.dimension_semantics<parallel>], iteration_bounds = array<i64: 1>, scalar_prefetch = 0 : i64, scratch_operands = 0 : i64, tpu.core_type = #tpu.core_type<tc>, window_params = [{transform_indices = @transform_0, window_bounds = array<i64: 8, 64>}, {transform_indices = @transform_1, window_bounds = array<i64: 8, 32>}, {transform_indices = @transform_2, window_bounds = array<i64: 8, 64>}]} {
    %c0 = arith.constant 0 : index
    %c0_0 = arith.constant 0 : index
    %0 = vector.load %arg2[%c0, %c0_0] : memref<8x32xf32, #tpu.memory_space<vmem>>, vector<8x32xf32>
    %1 = tpu.concatenate %0, %0 in 1 : vector<8x32xf32>, vector<8x32xf32> -> vector<8x64xf32>
    %c0_1 = arith.constant 0 : index
    %c0_2 = arith.constant 0 : index
    %2 = vector.load %arg1[%c0_1, %c0_2] : memref<8x64xf32, #tpu.memory_space<vmem>>, vector<8x64xf32>
    %3 = arith.addf %2, %1 : vector<8x64xf32>
    %c0_3 = arith.constant 0 : index
    %c0_4 = arith.constant 0 : index
    %4 = vector.load %arg3[%c0_3, %c0_4] : memref<8x64xf32, #tpu.memory_space<vmem>>, vector<8x64xf32>
    tpu.vector_store %arg3[%c0_3, %c0_4], %3 {strides = array<i32>} : memref<8x64xf32, #tpu.memory_space<vmem>>, vector<8x64xf32>,
    return
  }
  func.func @transform_0(%arg0: i32) -> (i32, i32) {
    %c0_i32 = arith.constant 0 : i32
    %c0_i32_0 = arith.constant 0 : i32
    return %arg0, %c0_i32 : i32, i32
  }
  func.func @transform_1(%arg0: i32) -> (i32, i32) {
    %c0_i32 = arith.constant 0 : i32
    %c0_i32_0 = arith.constant 0 : i32
    return %arg0, %c0_i32 : i32, i32
  }
  func.func @transform_2(%arg0: i32) -> (i32, i32) {
    %c0_i32 = arith.constant 0 : i32
    %c0_i32_0 = arith.constant 0 : i32
    return %arg0, %c0_i32 : i32, i32
  }
}

</mosaic_0001>

<llo_original>
// kernel: tpu_custom_call.1
$region0: #{tpu_custom_call.1}
  #allocation0 [shape = 'u32[]', space=smem, size = 0x4, offset = 0x4, fixed_abs, tag = 'smem constant byte address 0x4 - core index']
  #allocation1 [shape = 'u32[144,128]{1,0:T(1,128)}', space=vmem, size = 0x12000, scoped, tag = 'internal scratch']
  %s0 = inlined_call_operand.hbm [shape: f32[8,64], index: 0, kind: input, shape index: {}]
  %s1 = inlined_call_operand.hbm [shape: f32[8,32], index: 1, kind: input, shape index: {}]
  %s2 = inlined_call_operand.hbm [shape: f32[8,64], index: 2, kind: output, shape index: {}]
  %s3 = sld [smem:[#allocation0]]
  $region26: #{tpu_custom_call.1} parent=0
    _
  %s5 = ssub.s32 1, %s3
  %s6 = scalar_select 0, %s5, %s3
  $region1: #{tpu_custom_call.1} parent=0
    #allocation2 [shape = 'u8[4096]{0}', space=vmem, size = 0x1000, scoped, tag = 'input window, operand 0, single buffered']
    #allocation3 [shape = 's32[1]{0}', space=sflag, size = 0x4, scoped, tag = 'scoped memory for tpu_custom_call.1']
    #allocation4 [shape = 's32[1]{0}', space=sflag, size = 0x4, scoped, tag = 'scoped memory for tpu_custom_call.1']
    #allocation5 [shape = 'u8[4096]{0}', space=vmem, size = 0x1000, scoped, tag = 'input window, operand 1, single buffered']
    #allocation6 [shape = 's32[1]{0}', space=sflag, size = 0x4, scoped, tag = 'scoped memory for tpu_custom_call.1']
    #allocation7 [shape = 'u8[4096]{0}', space=vmem, size = 0x1000, scoped, tag = 'output window, operand 0, single buffered']
    %7 = vsyncpa [#allocation3], 0
    %8 = vsyncpa [#allocation6], 0
    %9 = vsyncpa [#allocation4], 0
    // Predicated region
    $region2: #{tpu_custom_call.1} parent=1 // pred_check
      _
    $region3: #{tpu_custom_call.1} parent=1 // pred_check_branch
      %11 = sbr.rel (0) target = $region5
    $region4: #{tpu_custom_call.1} parent=1 // pred_region
      %s13 = ssub.s32 128, 128
      %14 = vsyncadd [#allocation3], %s13
      %s16 = sshll.u32 [#allocation2], 4
      %s17 = int_to_ptr.vmem [resolvable:$true] %s16
      %19 = dma.hbm_to_vmem [thread:$0]  %s0, 128, %s17, [#allocation3]
    $region5: #{tpu_custom_call.1} parent=1 // pred_fallthru
      _
    // Predicated region
    $region6: #{tpu_custom_call.1} parent=1 // pred_check
      _
    $region7: #{tpu_custom_call.1} parent=1 // pred_check_branch
      %21 = sbr.rel (0) target = $region9
    $region8: #{tpu_custom_call.1} parent=1 // pred_region
      %s23 = ssub.s32 128, 128
      %24 = vsyncadd [#allocation6], %s23
      %s26 = sshll.u32 [#allocation5], 4
      %s27 = int_to_ptr.vmem [resolvable:$true] %s26
      %29 = dma.hbm_to_vmem [thread:$0]  %s1, 128, %s27, [#allocation6]
    $region9: #{tpu_custom_call.1} parent=1 // pred_fallthru
      _
    // Predicated region
    $region10: #{tpu_custom_call.1} parent=1 // pred_check
      _
    $region11: #{tpu_custom_call.1} parent=1 // pred_check_branch
      %31 = sbr.rel (0) target = $region13
    $region12: #{tpu_custom_call.1} parent=1 // pred_region
      %32 = dma.done [#allocation3], 128
    $region13: #{tpu_custom_call.1} parent=1 // pred_fallthru
      _
    // Predicated region
    $region14: #{tpu_custom_call.1} parent=1 // pred_check
      _
    $region15: #{tpu_custom_call.1} parent=1 // pred_check_branch
      %34 = sbr.rel (0) target = $region17
    $region16: #{tpu_custom_call.1} parent=1 // pred_region
      %35 = dma.done [#allocation6], 128
    $region17: #{tpu_custom_call.1} parent=1 // pred_fallthru
      _
    %v36 = vld [vmem:[#allocation5] sm:$0xff]
    %38 = vrot.lane.b32.xlu0 %v36, 32
    %v39 = vpop.permute.xlu0 %38
    %vm41 = vcmask 261120
    %v42 = vsel %vm41, %v36, %v39
    %v43 = vld [vmem:[#allocation2] sm:$0xff]
    %v44 = vadd.f32 %v43, %v42
    %vm45 = vcmask 523264
    %46 = vst.msk [vmem:[#allocation7] sm:$0xff] %vm45, %v44
    // Predicated region
    $region18: #{tpu_custom_call.1} parent=1 // pred_check
      _
    $region19: #{tpu_custom_call.1} parent=1 // pred_check_branch
      %48 = sbr.rel (0) target = $region21
    $region20: #{tpu_custom_call.1} parent=1 // pred_region
      %s50 = ssub.s32 128, 128
      %51 = vsyncadd [#allocation4], %s50
      %s53 = sshll.u32 [#allocation7], 4
      %s54 = int_to_ptr.vmem [resolvable:$true] %s53
      %56 = dma.vmem_to_hbm [thread:$0]  %s54, 128, %s2, [#allocation4]
    $region21: #{tpu_custom_call.1} parent=1 // pred_fallthru
      _
    // Predicated region
    $region22: #{tpu_custom_call.1} parent=1 // pred_check
      _
    $region23: #{tpu_custom_call.1} parent=1 // pred_check_branch
      %58 = sbr.rel (0) target = $region25
    $region24: #{tpu_custom_call.1} parent=1 // pred_region
      %59 = dma.done [#allocation4], 128
    $region25: #{tpu_custom_call.1} parent=1 // pred_fallthru
      _
    %60 = vsyncpa [#allocation3], 1
    %61 = vsyncpa [#allocation6], 1
    %62 = vsyncpa [#allocation4], 1

</llo_original>
